<compile_context>
chip_gen: v7x
topology: tpu7x:2x2x1
jax: 0.10.0
libtpu: 0.0.40
codegen_flags: <defaults>
</compile_context>

<pallas_src>
import jax
import jax.numpy as jnp
from jax import lax
from jax.experimental import pallas as pl
from jax.experimental.pallas import tpu as pltpu


def _round_up(x, m):
    return (x + m - 1) // m * m


def critic_mlp_kernel(x_ref, w1_ref, b1_ref, w2_ref, b2_ref, w3t_ref, b3_ref,
                      o_ref):
    """One batch tile: relu(x@W1+b1) -> relu(.@W2+b2) -> value head.

    o_ref block is (value_size, tile_b): the batch tile is on the lane axis so
    the writeback is a full-lane, unmasked store.
    """
    cdt = w1_ref.dtype                       # MXU operand dtype (bf16 or f32)

    # Cast x in-kernel (no extra wrapper-side HBM pass over x).
    x = x_ref[...].astype(cdt)

    # Layer 1: MXU matmul with f32 accumulation; bias + ReLU in f32 on the VPU.
    h1 = jnp.dot(x, w1_ref[...], preferred_element_type=jnp.float32)
    h1 = jnp.maximum(h1 + b1_ref[...], 0.0)

    # Layer 2.
    h2 = jnp.dot(h1.astype(cdt), w2_ref[...], preferred_element_type=jnp.float32)
    h2 = jnp.maximum(h2 + b2_ref[...], 0.0)

    # Layer 3 (value head), lane-dense: (value, hp) x (tb, hp)^T -> (value, tb).
    out = lax.dot_general(
        w3t_ref[...], h2.astype(w3t_ref.dtype),
        dimension_numbers=(((1,), (1,)), ((), ())),
        preferred_element_type=jnp.float32)

    if o_ref.shape[0] == 1:
        # value_size == 1: b3 is an SMEM (1,1) scalar (no VMEM block / DMA).
        out = out + b3_ref[0, 0]
    else:
        # General value_size: b3 is a VMEM (value, 1) column, broadcast on lanes.
        out = out + b3_ref[...]
    o_ref[...] = out.astype(o_ref.dtype)


def critic_forward(x, params, *, num_steps=1, compute_dtype=jnp.bfloat16):
    """Fused Critic forward.  x: (batch, state) f32.  Returns (batch, value) f32.

    num_steps: grid steps over the batch dimension.
      * v5e / v6e (one TensorCore): 1 — the grid is a serial loop and per-step
        pipeline overhead dominates a kernel this small.
      * v7x (two TensorCores): 2 — one parallel step per core.
    """
    w1, b1, w2, b2, w3, b3 = params
    batch, state_size = x.shape
    hidden = w1.shape[1]
    value_size = w3.shape[1]

    # ---- Pad hidden to a multiple of 128 lanes (exact: ReLU(0)=0 and the
    # zero-padded rows of W3 contribute nothing).
    hp = _round_up(hidden, 128)
    if hp != hidden:
        p = hp - hidden
        w1 = jnp.pad(w1, ((0, 0), (0, p)))
        b1 = jnp.pad(b1, ((0, 0), (0, p)))
        w2 = jnp.pad(w2, ((0, p), (0, p)))
        b2 = jnp.pad(b2, ((0, 0), (0, p)))
        w3 = jnp.pad(w3, ((0, p), (0, 0)))

    # ---- Operand dtypes: bf16 (or f32) weights for the MXU, f32 biases.
    w1_c = w1.astype(compute_dtype)
    w2_c = w2.astype(compute_dtype)
    w3t_c = jnp.transpose(w3).astype(compute_dtype)       # (value, hp)
    b1_f = b1.astype(jnp.float32)
    b2_f = b2.astype(jnp.float32)
    b3_f = b3.astype(jnp.float32)                         # (1, value)

    # ---- Batch tiling.  x stays f32: with one grid step the block equals the
    # full array, so no batch padding and no wrapper cast/pad HBM passes.
    num_steps = max(1, int(num_steps))
    if num_steps == 1:
        tb, bp = batch, batch
        x_in = x
    else:
        # Lane-dense output block => tb must be a multiple of 128 when tb != bp.
        tb = _round_up(pl.cdiv(batch, num_steps), 128)
        bp = tb * num_steps
        x_in = jnp.pad(x, ((0, bp - batch), (0, 0))) if bp != batch else x

    const = lambda i: (0, 0)

    # Resident weights: constant block index => default double buffering is
    # pure VMEM waste.  Only matters for large hidden (v7x 64 MiB VMEM first).
    w_kwargs = {"pipeline_mode": pl.Buffered(1)} if hp > 512 else {}
    w1_spec = pl.BlockSpec((state_size, hp), const, **w_kwargs)
    w2_spec = pl.BlockSpec((hp, hp), const, **w_kwargs)
    w3t_spec = pl.BlockSpec((value_size, hp), const)

    if value_size == 1:
        b3_spec = pl.BlockSpec(memory_space=pltpu.MemorySpace.SMEM)
        b3_arg = b3_f                                      # (1, 1) scalar in SMEM
    else:
        b3_spec = pl.BlockSpec((value_size, 1), const)
        b3_arg = jnp.transpose(b3_f)                       # (value, 1) in VMEM

    grid_spec = pltpu.PrefetchScalarGridSpec(
        num_scalar_prefetch=0,
        grid=(num_steps,),
        in_specs=[
            pl.BlockSpec((tb, state_size), lambda i: (i, 0)),   # x tile (pipelined)
            w1_spec,                                            # W1 (resident)
            pl.BlockSpec((1, hp), const),                       # b1
            w2_spec,                                            # W2 (resident)
            pl.BlockSpec((1, hp), const),                       # b2
            w3t_spec,                                           # W3^T (resident)
            b3_spec,                                            # b3
        ],
        # Lane-dense output: batch tile on the lane axis.
        out_specs=pl.BlockSpec((value_size, tb), lambda i: (0, i)),
    )

    out_t = pl.pallas_call(
        critic_mlp_kernel,
        out_shape=jax.ShapeDtypeStruct((value_size, bp), jnp.float32),
        grid_spec=grid_spec,
        compiler_params=pltpu.CompilerParams(
            # "parallel" lets v7x split the batch grid across its 2 TensorCores;
            # no-op on single-TC v5e/v6e.
            dimension_semantics=("parallel",)),
    )(x_in, w1_c, b1_f, w2_c, b2_f, w3t_c, b3_arg)

    # Tiny (value, batch) -> (batch, value) transpose in the wrapper.
    return jnp.transpose(out_t[:, :batch])


def init_critic_params(key, state_size, value_size, hidden_size):
    """Init matching PyTorch nn.Linear default (U(-1/sqrt(fan_in), +)).
    Weights stored (in, out) so the kernel computes y = x @ W + b."""
    keys = jax.random.split(key, 6)

    def linear(kw, kb, fan_in, fan_out):
        bound = 1.0 / jnp.sqrt(jnp.float32(fan_in))
        w = jax.random.uniform(kw, (fan_in, fan_out), jnp.float32, -bound, bound)
        b = jax.random.uniform(kb, (1, fan_out), jnp.float32, -bound, bound)
        return w, b

    w1, b1 = linear(keys[0], keys[1], state_size, hidden_size)
    w2, b2 = linear(keys[2], keys[3], hidden_size, hidden_size)
    w3, b3 = linear(keys[4], keys[5], hidden_size, value_size)
    return (w1, b1, w2, b2, w3, b3)


if __name__ == "__main__":
    # Small shapes consistent with the Critic forward pass.
    batch = 256
    state_size = 8
    hidden_size = 128
    value_size = 1

    key = jax.random.PRNGKey(0)
    k_params, k_x = jax.random.split(key)

    params = init_critic_params(k_params, state_size, value_size, hidden_size)
    x = jax.random.normal(k_x, (batch, state_size), dtype=jnp.float32)

    # Plain-JAX f32 reference (same math as the PyTorch module).
    w1, b1, w2, b2, w3, b3 = params
    ref = jnp.maximum(x @ w1 + b1, 0.0)
    ref = jnp.maximum(ref @ w2 + b2, 0.0)
    ref = ref @ w3 + b3

    # f32 operands, single grid step (v5e/v6e sweet spot): tight check.
    out_f32 = jax.block_until_ready(
        critic_forward(x, params, num_steps=1, compute_dtype=jnp.float32))
    assert out_f32.shape == (batch, value_size)
    assert jnp.allclose(out_f32, ref, atol=1e-4, rtol=1e-4)

    # f32 operands, two grid steps (v7x dual-TensorCore sweet spot): tight check.
    out_2step = jax.block_until_ready(
        critic_forward(x, params, num_steps=2, compute_dtype=jnp.float32))
    assert out_2step.shape == (batch, value_size)
    assert jnp.allclose(out_2step, ref, atol=1e-4, rtol=1e-4)

    # bf16 operands / f32 accumulation (MXU-native on v5e/v6e/v7x): loose check.
    out_bf16 = jax.block_until_ready(
        critic_forward(x, params, num_steps=1, compute_dtype=jnp.bfloat16))
    assert out_bf16.shape == (batch, value_size)
    assert jnp.allclose(out_bf16, ref, atol=5e-2, rtol=5e-2)

    print("KERNEL_OK")
</pallas_src>

<mosaic_0001>
module attributes {stable_mosaic.version = 11 : i64} {
  func.func @critic_mlp_kernel(%arg0: i32, %arg1: memref<256x8xf32, #tpu.memory_space<vmem>>, %arg2: memref<8x128xf32, #tpu.memory_space<vmem>>, %arg3: memref<1x128xf32, #tpu.memory_space<vmem>>, %arg4: memref<128x128xf32, #tpu.memory_space<vmem>>, %arg5: memref<1x128xf32, #tpu.memory_space<vmem>>, %arg6: memref<1x128xf32, #tpu.memory_space<vmem>>, %arg7: memref<1x1xf32, #tpu.memory_space<smem>>, %arg8: memref<1x256xf32, #tpu.memory_space<vmem>>) attributes {dimension_semantics = [#tpu.dimension_semantics<parallel>], iteration_bounds = array<i64: 1>, scalar_prefetch = 0 : i64, scratch_operands = 0 : i64, tpu.core_type = #tpu.core_type<tc>, window_params = [{transform_indices = @transform_0, window_bounds = array<i64: 256, 8>}, {pipeline_mode = #tpu.pipeline_mode<synchronous>, transform_indices = @transform_1, window_bounds = array<i64: 8, 128>}, {pipeline_mode = #tpu.pipeline_mode<synchronous>, transform_indices = @transform_2, window_bounds = array<i64: 1, 128>}, {pipeline_mode = #tpu.pipeline_mode<synchronous>, transform_indices = @transform_3, window_bounds = array<i64: 128, 128>}, {pipeline_mode = #tpu.pipeline_mode<synchronous>, transform_indices = @transform_4, window_bounds = array<i64: 1, 128>}, {pipeline_mode = #tpu.pipeline_mode<synchronous>, transform_indices = @transform_5, window_bounds = array<i64: 1, 128>}, {transform_indices = @transform_6, window_bounds = array<i64: 1, 1>}, {transform_indices = @transform_7, window_bounds = array<i64: 1, 256>}]} {
    %c0 = arith.constant 0 : index
    %c0_0 = arith.constant 0 : index
    %0 = vector.load %arg1[%c0, %c0_0] : memref<256x8xf32, #tpu.memory_space<vmem>>, vector<256x8xf32>
    %c0_1 = arith.constant 0 : index
    %c0_2 = arith.constant 0 : index
    %1 = vector.load %arg2[%c0_1, %c0_2] : memref<8x128xf32, #tpu.memory_space<vmem>>, vector<8x128xf32>
    %cst = arith.constant dense<0.000000e+00> : vector<256x128xf32>
    %2 = tpu.matmul %0, %1, %cst {dimension_numbers = #tpu.dot_dimension_numbers<[1], [0], [0], [1], [0, 0, 1, 1], [], []>} : vector<256x8xf32>, vector<8x128xf32>, vector<256x128xf32> -> vector<256x128xf32>
    %c0_3 = arith.constant 0 : index
    %c0_4 = arith.constant 0 : index
    %3 = vector.load %arg3[%c0_3, %c0_4] : memref<1x128xf32, #tpu.memory_space<vmem>>, vector<1x128xf32>
    %4 = vector.broadcast %3 : vector<1x128xf32> to vector<256x128xf32>
    %5 = arith.addf %2, %4 : vector<256x128xf32>
    %cst_5 = arith.constant 0.000000e+00 : f32
    %6 = vector.broadcast %cst_5 : f32 to vector<256x128xf32>
    %7 = arith.maximumf %5, %6 : vector<256x128xf32>
    %c0_6 = arith.constant 0 : index
    %c0_7 = arith.constant 0 : index
    %8 = vector.load %arg4[%c0_6, %c0_7] : memref<128x128xf32, #tpu.memory_space<vmem>>, vector<128x128xf32>
    %cst_8 = arith.constant dense<0.000000e+00> : vector<256x128xf32>
    %9 = tpu.matmul %7, %8, %cst_8 {dimension_numbers = #tpu.dot_dimension_numbers<[1], [0], [0], [1], [0, 0, 1, 1], [], []>} : vector<256x128xf32>, vector<128x128xf32>, vector<256x128xf32> -> vector<256x128xf32>
    %c0_9 = arith.constant 0 : index
    %c0_10 = arith.constant 0 : index
    %10 = vector.load %arg5[%c0_9, %c0_10] : memref<1x128xf32, #tpu.memory_space<vmem>>, vector<1x128xf32>
    %11 = vector.broadcast %10 : vector<1x128xf32> to vector<256x128xf32>
    %12 = arith.addf %9, %11 : vector<256x128xf32>
    %cst_11 = arith.constant 0.000000e+00 : f32
    %13 = vector.broadcast %cst_11 : f32 to vector<256x128xf32>
    %14 = arith.maximumf %12, %13 : vector<256x128xf32>
    %c0_12 = arith.constant 0 : index
    %c0_13 = arith.constant 0 : index
    %15 = vector.load %arg6[%c0_12, %c0_13] : memref<1x128xf32, #tpu.memory_space<vmem>>, vector<1x128xf32>
    %cst_14 = arith.constant dense<0.000000e+00> : vector<1x256xf32>
    %16 = tpu.matmul %15, %14, %cst_14 {dimension_numbers = #tpu.dot_dimension_numbers<[1], [1], [0], [0], [0, 0, 1, 0], [], []>} : vector<1x128xf32>, vector<256x128xf32>, vector<1x256xf32> -> vector<1x256xf32>
    %c0_15 = arith.constant 0 : index
    %c0_16 = arith.constant 0 : index
    %17 = memref.load %arg7[%c0_15, %c0_16] : memref<1x1xf32, #tpu.memory_space<smem>>
    %18 = vector.broadcast %17 : f32 to vector<1x256xf32>
    %19 = arith.addf %16, %18 : vector<1x256xf32>
    %c0_17 = arith.constant 0 : index
    %c0_18 = arith.constant 0 : index
    %20 = vector.load %arg8[%c0_17, %c0_18] : memref<1x256xf32, #tpu.memory_space<vmem>>, vector<1x256xf32>
    tpu.vector_store %arg8[%c0_17, %c0_18], %19 {strides = array<i32>} : memref<1x256xf32, #tpu.memory_space<vmem>>, vector<1x256xf32>,
    return
  }
  func.func @transform_0(%arg0: i32) -> (i32, i32) {
    %c0_i32 = arith.constant 0 : i32
    %c0_i32_0 = arith.constant 0 : i32
    return %arg0, %c0_i32 : i32, i32
  }
  func.func @transform_1(%arg0: i32) -> (i32, i32) {
    %c0_i32 = arith.constant 0 : i32
    %c0_i32_0 = arith.constant 0 : i32
    %c0_i32_1 = arith.constant 0 : i32
    return %c0_i32, %c0_i32_0 : i32, i32
  }
  func.func @transform_2(%arg0: i32) -> (i32, i32) {
    %c0_i32 = arith.constant 0 : i32
    %c0_i32_0 = arith.constant 0 : i32
    %c0_i32_1 = arith.constant 0 : i32
    return %c0_i32, %c0_i32_0 : i32, i32
  }
  func.func @transform_3(%arg0: i32) -> (i32, i32) {
    %c0_i32 = arith.constant 0 : i32
    %c0_i32_0 = arith.constant 0 : i32
    %c0_i32_1 = arith.constant 0 : i32
    return %c0_i32, %c0_i32_0 : i32, i32
  }
  func.func @transform_4(%arg0: i32) -> (i32, i32) {
    %c0_i32 = arith.constant 0 : i32
    %c0_i32_0 = arith.constant 0 : i32
    %c0_i32_1 = arith.constant 0 : i32
    return %c0_i32, %c0_i32_0 : i32, i32
  }
  func.func @transform_5(%arg0: i32) -> (i32, i32) {
    %c0_i32 = arith.constant 0 : i32
    %c0_i32_0 = arith.constant 0 : i32
    %c0_i32_1 = arith.constant 0 : i32
    return %c0_i32, %c0_i32_0 : i32, i32
  }
  func.func @transform_6(%arg0: i32) -> (i32, i32) {
    %c0_i32 = arith.constant 0 : i32
    %c0_i32_0 = arith.constant 0 : i32
    %c0_i32_1 = arith.constant 0 : i32
    return %c0_i32, %c0_i32_0 : i32, i32
  }
  func.func @transform_7(%arg0: i32) -> (i32, i32) {
    %c0_i32 = arith.constant 0 : i32
    %c0_i32_0 = arith.constant 0 : i32
    return %c0_i32, %arg0 : i32, i32
  }
}

</mosaic_0001>

<llo_original>
// kernel: tpu_custom_call.1
$region0: #{tpu_custom_call.1}
  #allocation0 [shape = 'u32[]', space=smem, size = 0x4, offset = 0x4, fixed_abs, tag = 'smem constant byte address 0x4 - core index']
  #allocation1 [shape = 'u32[144,128]{1,0:T(1,128)}', space=vmem, size = 0x12000, scoped, tag = 'internal scratch']
  #allocation2 [shape = 'f32[1,1]{1,0:T(1,128)S(6)}', space=smem, size = 0x200, scoped, tag = 'scoped memory for tpu_custom_call.1']
  %s0 = inlined_call_operand.vmem [shape: f32[256,8], index: 0, kind: input, shape index: {}]
  %s1 = inlined_call_operand.vmem [shape: f32[8,128], index: 1, kind: input, shape index: {}]
  %s2 = inlined_call_operand.vmem [shape: f32[1,128], index: 2, kind: input, shape index: {}]
  %s3 = inlined_call_operand.vmem [shape: f32[128,128], index: 3, kind: input, shape index: {}]
  %s4 = inlined_call_operand.vmem [shape: f32[1,128], index: 4, kind: input, shape index: {}]
  %s5 = inlined_call_operand.vmem [shape: f32[1,128], index: 5, kind: input, shape index: {}]
  %s6 = inlined_call_operand.<no memory space> [shape: f32[1,1], index: 6, kind: input, shape index: {}]
  %s7 = inlined_call_operand.hbm [shape: f32[1,256], index: 7, kind: output, shape index: {}]
  %s8 = sld [smem:[#allocation0]]
  $region38: #{tpu_custom_call.1} parent=0
    _
  %s10 = ssub.s32 1, %s8
  %s11 = scalar_select 0, %s10, %s8
  %12 = sst [smem:[#allocation2]] %s6
  $region1: #{tpu_custom_call.1} parent=0
    #allocation3 [shape = 'u8[1024]{0}', space=vmem, size = 0x400, scoped, tag = 'output window, operand 0, single buffered']
    #allocation4 [shape = 's32[1]{0}', space=sflag, size = 0x4, scoped, tag = 'scoped memory for tpu_custom_call.1']
    %13 = vsyncpa [#allocation4], 0
    // Predicated region
    $region2: #{tpu_custom_call.1} parent=1 // pred_check
      _
    $region3: #{tpu_custom_call.1} parent=1 // pred_check_branch
      %15 = sbr.rel (0) target = $region5
    $region4: #{tpu_custom_call.1} parent=1 // pred_region
      _
    $region5: #{tpu_custom_call.1} parent=1 // pred_fallthru
      _
    // Predicated region
    $region6: #{tpu_custom_call.1} parent=1 // pred_check
      _
    $region7: #{tpu_custom_call.1} parent=1 // pred_check_branch
      %17 = sbr.rel (0) target = $region9
    $region8: #{tpu_custom_call.1} parent=1 // pred_region
      _
    $region9: #{tpu_custom_call.1} parent=1 // pred_fallthru
      _
    // Predicated region
    $region10: #{tpu_custom_call.1} parent=1 // pred_check
      _
    $region11: #{tpu_custom_call.1} parent=1 // pred_check_branch
      %19 = sbr.rel (0) target = $region13
    $region12: #{tpu_custom_call.1} parent=1 // pred_region
      _
    $region13: #{tpu_custom_call.1} parent=1 // pred_fallthru
      _
    // Predicated region
    $region14: #{tpu_custom_call.1} parent=1 // pred_check
      _
    $region15: #{tpu_custom_call.1} parent=1 // pred_check_branch
      %21 = sbr.rel (0) target = $region17
    $region16: #{tpu_custom_call.1} parent=1 // pred_region
      _
    $region17: #{tpu_custom_call.1} parent=1 // pred_fallthru
      _
    // Predicated region
    $region18: #{tpu_custom_call.1} parent=1 // pred_check
      _
    $region19: #{tpu_custom_call.1} parent=1 // pred_check_branch
      %23 = sbr.rel (0) target = $region21
    $region20: #{tpu_custom_call.1} parent=1 // pred_region
      _
    $region21: #{tpu_custom_call.1} parent=1 // pred_fallthru
      _
    // Predicated region
    $region22: #{tpu_custom_call.1} parent=1 // pred_check
      _
    $region23: #{tpu_custom_call.1} parent=1 // pred_check_branch
      %25 = sbr.rel (0) target = $region25
    $region24: #{tpu_custom_call.1} parent=1 // pred_region
      _
    $region25: #{tpu_custom_call.1} parent=1 // pred_fallthru
      _
    // Predicated region
    $region26: #{tpu_custom_call.1} parent=1 // pred_check
      _
    $region27: #{tpu_custom_call.1} parent=1 // pred_check_branch
      %27 = sbr.rel (0) target = $region29
    $region28: #{tpu_custom_call.1} parent=1 // pred_region
      _
    $region29: #{tpu_custom_call.1} parent=1 // pred_fallthru
      _
    %v28 = vld [vmem:[%s0] sm:$0xff]
    %v29 = vld [vmem:[%s0 + $0x8] sm:$0xff]
    %v30 = vld [vmem:[%s0 + $0x10] sm:$0xff]
    %v31 = vld [vmem:[%s0 + $0x18] sm:$0xff]
    %v32 = vld [vmem:[%s0 + $0x20] sm:$0xff]
    %v33 = vld [vmem:[%s0 + $0x28] sm:$0xff]
    %v34 = vld [vmem:[%s0 + $0x30] sm:$0xff]
    %v35 = vld [vmem:[%s0 + $0x38] sm:$0xff]
    %v36 = vld [vmem:[%s0 + $0x40] sm:$0xff]
    %v37 = vld [vmem:[%s0 + $0x48] sm:$0xff]
    %v38 = vld [vmem:[%s0 + $0x50] sm:$0xff]
    %v39 = vld [vmem:[%s0 + $0x58] sm:$0xff]
    %v40 = vld [vmem:[%s0 + $0x60] sm:$0xff]
    %v41 = vld [vmem:[%s0 + $0x68] sm:$0xff]
    %v42 = vld [vmem:[%s0 + $0x70] sm:$0xff]
    %v43 = vld [vmem:[%s0 + $0x78] sm:$0xff]
    %v44 = vld [vmem:[%s0 + $0x80] sm:$0xff]
    %v45 = vld [vmem:[%s0 + $0x88] sm:$0xff]
    %v46 = vld [vmem:[%s0 + $0x90] sm:$0xff]
    %v47 = vld [vmem:[%s0 + $0x98] sm:$0xff]
    %v48 = vld [vmem:[%s0 + $0xa0] sm:$0xff]
    %v49 = vld [vmem:[%s0 + $0xa8] sm:$0xff]
    %v50 = vld [vmem:[%s0 + $0xb0] sm:$0xff]
    %v51 = vld [vmem:[%s0 + $0xb8] sm:$0xff]
    %v52 = vld [vmem:[%s0 + $0xc0] sm:$0xff]
    %v53 = vld [vmem:[%s0 + $0xc8] sm:$0xff]
    %v54 = vld [vmem:[%s0 + $0xd0] sm:$0xff]
    %v55 = vld [vmem:[%s0 + $0xd8] sm:$0xff]
    %v56 = vld [vmem:[%s0 + $0xe0] sm:$0xff]
    %v57 = vld [vmem:[%s0 + $0xe8] sm:$0xff]
    %v58 = vld [vmem:[%s0 + $0xf0] sm:$0xff]
    %v59 = vld [vmem:[%s0 + $0xf8] sm:$0xff]
    %v60 = vld [vmem:[%s1] sm:$0xff]
    %v61 = vld [vmem:[%s2] sm:$0x1]
    %v63 = vlaneseq
    %v64 = vshrl.u32 %v63, 7
    %v65 = vsub.s32 0, %v64
    %v66 = vrot.slane %v61, %v65
    %vm68 = vcmask 64512
    %v70 = vsel %vm68, %v28, 0
    %v73 = vsel %vm68, %v29, 0
    %v76 = vsel %vm68, %v30, 0
    %v79 = vsel %vm68, %v31, 0
    %v82 = vsel %vm68, %v32, 0
    %v85 = vsel %vm68, %v33, 0
    %v88 = vsel %vm68, %v34, 0
    %v91 = vsel %vm68, %v35, 0
    %v94 = vsel %vm68, %v36, 0
    %v97 = vsel %vm68, %v37, 0
    %v100 = vsel %vm68, %v38, 0
    %v103 = vsel %vm68, %v39, 0
    %v106 = vsel %vm68, %v40, 0
    %v109 = vsel %vm68, %v41, 0
    %v112 = vsel %vm68, %v42, 0
    %v115 = vsel %vm68, %v43, 0
    %v118 = vsel %vm68, %v44, 0
    %v121 = vsel %vm68, %v45, 0
    %v124 = vsel %vm68, %v46, 0
    %v127 = vsel %vm68, %v47, 0
    %v130 = vsel %vm68, %v48, 0
    %v133 = vsel %vm68, %v49, 0
    %v136 = vsel %vm68, %v50, 0
    %v139 = vsel %vm68, %v51, 0
    %v142 = vsel %vm68, %v52, 0
    %v145 = vsel %vm68, %v53, 0
    %v148 = vsel %vm68, %v54, 0
    %v151 = vsel %vm68, %v55, 0
    %v154 = vsel %vm68, %v56, 0
    %v157 = vsel %vm68, %v57, 0
    %v160 = vsel %vm68, %v58, 0
    %v163 = vsel %vm68, %v59, 0
    %165 = vmatprep.subr.mxu0 0.0
    %166 = vmatpush1.msra.mxu0 %v60
    %167 = vmatprep.subr.mxu0 0.0
    %168 = vmatpush1.msra.mxu0 0.0
    %169 = vmatprep.subr.mxu0 0.0
    %170 = vmatpush1.msra.mxu0 0.0
    %171 = vmatprep.subr.mxu0 0.0
    %172 = vmatpush1.msra.mxu0 0.0
    %173 = vmatprep.subr.mxu0 0.0
    %174 = vmatpush1.msra.mxu0 0.0
    %175 = vmatprep.subr.mxu0 0.0
    %176 = vmatpush1.msra.mxu0 0.0
    %177 = vmatprep.subr.mxu0 0.0
    %178 = vmatpush1.msra.mxu0 0.0
    %179 = vmatprep.subr.mxu0 0.0
    %180 = vmatpush1.msra.mxu0 0.0
    %181 = vmatprep.subr.mxu0 0.0
    %182 = vmatpush1.msra.mxu0 0.0
    %183 = vmatprep.subr.mxu0 0.0
    %184 = vmatpush1.msra.mxu0 0.0
    %185 = vmatprep.subr.mxu0 0.0
    %186 = vmatpush1.msra.mxu0 0.0
    %187 = vmatprep.subr.mxu0 0.0
    %188 = vmatpush1.msra.mxu0 0.0
    %189 = vmatprep.subr.mxu0 0.0
    %190 = vmatpush1.msra.mxu0 0.0
    %191 = vmatprep.subr.mxu0 0.0
    %192 = vmatpush1.msra.mxu0 0.0
    %193 = vmatprep.subr.mxu0 0.0
    %194 = vmatpush1.msra.mxu0 0.0
    %195 = vmatprep.subr.mxu0 0.0
    %196 = vmatpush1.msra.mxu0 0.0
    %197 = vmatprep.subr.mxu0 0.0
    %198 = vmatpush1.msra.mxu0 0.0
    %199 = vmatprep.subr.mxu0 0.0
    %200 = vmatpush1.msra.mxu0 0.0
    %201 = vmatprep.subr.mxu0 0.0
    %202 = vmatpush1.msra.mxu0 0.0
    %203 = vmatprep.subr.mxu0 0.0
    %204 = vmatpush1.msra.mxu0 0.0
    %205 = vmatprep.subr.mxu0 0.0
    %206 = vmatpush1.msra.mxu0 0.0
    %207 = vmatprep.subr.mxu0 0.0
    %208 = vmatpush1.msra.mxu0 0.0
    %209 = vmatprep.subr.mxu0 0.0
    %210 = vmatpush1.msra.mxu0 0.0
    %211 = vmatprep.subr.mxu0 0.0
    %212 = vmatpush1.msra.mxu0 0.0
    %213 = vmatprep.subr.mxu0 0.0
    %214 = vmatpush1.msra.mxu0 0.0
    %215 = vmatprep.subr.mxu0 0.0
    %216 = vmatpush1.msra.mxu0 0.0
    %217 = vmatprep.subr.mxu0 0.0
    %218 = vmatpush1.msra.mxu0 0.0
    %219 = vmatprep.subr.mxu0 0.0
    %220 = vmatpush1.msra.mxu0 0.0
    %221 = vmatprep.subr.mxu0 0.0
    %222 = vmatpush1.msra.mxu0 0.0
    %223 = vmatprep.subr.mxu0 0.0
    %224 = vmatpush1.msra.mxu0 0.0
    %225 = vmatprep.subr.mxu0 0.0
    %226 = vmatpush1.msra.mxu0 0.0
    %227 = vmatprep.subr.mxu0 0.0
    %228 = vmatpush1.msra.mxu0 0.0
    %229 = vmatprep.mubr.f32.mxu0 0.0
    %230 = vmatmul.mubr.f32.gmra.mrb[0].mxu0 %v70
    %v231 = vpop.f32.mrb[0].mxu0
    %v232 = vadd.f32 %v66, %v231
    %v233 = vpop.f32.mrb[0].mxu0
    %234 = vmatprep.mubr.f32.mxu0 0.0
    %235 = vmatmul.mubr.f32.gmra.mrb[0].mxu0 %v73
    %v236 = vpop.f32.mrb[0].mxu0
    %v237 = vadd.f32 %v66, %v236
    %v238 = vpop.f32.mrb[0].mxu0
    %239 = vmatprep.mubr.f32.mxu0 0.0
    %240 = vmatmul.mubr.f32.gmra.mrb[0].mxu0 %v76
    %v241 = vpop.f32.mrb[0].mxu0
    %v242 = vadd.f32 %v66, %v241
    %v243 = vpop.f32.mrb[0].mxu0
    %244 = vmatprep.mubr.f32.mxu0 0.0
    %245 = vmatmul.mubr.f32.gmra.mrb[0].mxu0 %v79
    %v246 = vpop.f32.mrb[0].mxu0
    %v247 = vadd.f32 %v66, %v246
    %v248 = vpop.f32.mrb[0].mxu0
    %249 = vmatprep.mubr.f32.mxu0 0.0
    %250 = vmatmul.mubr.f32.gmra.mrb[0].mxu0 %v82
    %v251 = vpop.f32.mrb[0].mxu0
    %v252 = vadd.f32 %v66, %v251
    %v253 = vpop.f32.mrb[0].mxu0
    %254 = vmatprep.mubr.f32.mxu0 0.0
    %255 = vmatmul.mubr.f32.gmra.mrb[0].mxu0 %v85
    %v256 = vpop.f32.mrb[0].mxu0
    %v257 = vadd.f32 %v66, %v256
    %v258 = vpop.f32.mrb[0].mxu0
    %259 = vmatprep.mubr.f32.mxu0 0.0
    %260 = vmatmul.mubr.f32.gmra.mrb[0].mxu0 %v88
    %v261 = vpop.f32.mrb[0].mxu0
    %v262 = vadd.f32 %v66, %v261
    %v263 = vpop.f32.mrb[0].mxu0
    %264 = vmatprep.mubr.f32.mxu0 0.0
    %265 = vmatmul.mubr.f32.gmra.mrb[0].mxu0 %v91
    %v266 = vpop.f32.mrb[0].mxu0
    %v267 = vadd.f32 %v66, %v266
    %v268 = vpop.f32.mrb[0].mxu0
    %269 = vmatprep.mubr.f32.mxu0 0.0
    %270 = vmatmul.mubr.f32.gmra.mrb[0].mxu0 %v94
    %v271 = vpop.f32.mrb[0].mxu0
    %v272 = vadd.f32 %v66, %v271
    %v273 = vpop.f32.mrb[0].mxu0
    %274 = vmatprep.mubr.f32.mxu0 0.0
    %275 = vmatmul.mubr.f32.gmra.mrb[0].mxu0 %v97
    %v276 = vpop.f32.mrb[0].mxu0
    %v277 = vadd.f32 %v66, %v276
    %v278 = vpop.f32.mrb[0].mxu0
    %279 = vmatprep.mubr.f32.mxu0 0.0
    %280 = vmatmul.mubr.f32.gmra.mrb[0].mxu0 %v100
    %v281 = vpop.f32.mrb[0].mxu0
    %v282 = vadd.f32 %v66, %v281
    %v283 = vpop.f32.mrb[0].mxu0
    %284 = vmatprep.mubr.f32.mxu0 0.0
    %285 = vmatmul.mubr.f32.gmra.mrb[0].mxu0 %v103
    %v286 = vpop.f32.mrb[0].mxu0
    %v287 = vadd.f32 %v66, %v286
    %v288 = vpop.f32.mrb[0].mxu0
    %289 = vmatprep.mubr.f32.mxu0 0.0
    %290 = vmatmul.mubr.f32.gmra.mrb[0].mxu0 %v106
    %v291 = vpop.f32.mrb[0].mxu0
    %v292 = vadd.f32 %v66, %v291
    %v293 = vpop.f32.mrb[0].mxu0
    %294 = vmatprep.mubr.f32.mxu0 0.0
    %295 = vmatmul.mubr.f32.gmra.mrb[0].mxu0 %v109
    %v296 = vpop.f32.mrb[0].mxu0
    %v297 = vadd.f32 %v66, %v296
    %v298 = vpop.f32.mrb[0].mxu0
    %299 = vmatprep.mubr.f32.mxu0 0.0
    %300 = vmatmul.mubr.f32.gmra.mrb[0].mxu0 %v112
    %v301 = vpop.f32.mrb[0].mxu0
    %v302 = vadd.f32 %v66, %v301
    %v303 = vpop.f32.mrb[0].mxu0
    %304 = vmatprep.mubr.f32.mxu0 0.0
    %305 = vmatmul.mubr.f32.gmra.mrb[0].mxu0 %v115
    %v306 = vpop.f32.mrb[0].mxu0
    %v307 = vadd.f32 %v66, %v306
    %v308 = vpop.f32.mrb[0].mxu0
    %309 = vmatprep.mubr.f32.mxu0 0.0
    %310 = vmatmul.mubr.f32.gmra.mrb[0].mxu0 %v118
    %v311 = vpop.f32.mrb[0].mxu0
    %v312 = vadd.f32 %v66, %v311
    %v313 = vpop.f32.mrb[0].mxu0
    %314 = vmatprep.mubr.f32.mxu0 0.0
    %315 = vmatmul.mubr.f32.gmra.mrb[0].mxu0 %v121
    %v316 = vpop.f32.mrb[0].mxu0
    %v317 = vadd.f32 %v66, %v316
    %v318 = vpop.f32.mrb[0].mxu0
    %319 = vmatprep.mubr.f32.mxu0 0.0
    %320 = vmatmul.mubr.f32.gmra.mrb[0].mxu0 %v124
    %v321 = vpop.f32.mrb[0].mxu0
    %v322 = vadd.f32 %v66, %v321
    %v323 = vpop.f32.mrb[0].mxu0
    %324 = vmatprep.mubr.f32.mxu0 0.0
    %325 = vmatmul.mubr.f32.gmra.mrb[0].mxu0 %v127
    %v326 = vpop.f32.mrb[0].mxu0
    %v327 = vadd.f32 %v66, %v326
    %v328 = vpop.f32.mrb[0].mxu0
    %329 = vmatprep.mubr.f32.mxu0 0.0
    %330 = vmatmul.mubr.f32.gmra.mrb[0].mxu0 %v130
    %v331 = vpop.f32.mrb[0].mxu0
    %v332 = vadd.f32 %v66, %v331
    %v333 = vpop.f32.mrb[0].mxu0
    %334 = vmatprep.mubr.f32.mxu0 0.0
    %335 = vmatmul.mubr.f32.gmra.mrb[0].mxu0 %v133
    %v336 = vpop.f32.mrb[0].mxu0
    %v337 = vadd.f32 %v66, %v336
    %v338 = vpop.f32.mrb[0].mxu0
    %339 = vmatprep.mubr.f32.mxu0 0.0
    %340 = vmatmul.mubr.f32.gmra.mrb[0].mxu0 %v136
    %v341 = vpop.f32.mrb[0].mxu0
    %v342 = vadd.f32 %v66, %v341
    %v343 = vpop.f32.mrb[0].mxu0
    %344 = vmatprep.mubr.f32.mxu0 0.0
    %345 = vmatmul.mubr.f32.gmra.mrb[0].mxu0 %v139
    %v346 = vpop.f32.mrb[0].mxu0
    %v347 = vadd.f32 %v66, %v346
    %v348 = vpop.f32.mrb[0].mxu0
    %349 = vmatprep.mubr.f32.mxu0 0.0
    %350 = vmatmul.mubr.f32.gmra.mrb[0].mxu0 %v142
    %v351 = vpop.f32.mrb[0].mxu0
    %v352 = vadd.f32 %v66, %v351
    %v353 = vpop.f32.mrb[0].mxu0
    %354 = vmatprep.mubr.f32.mxu0 0.0
    %355 = vmatmul.mubr.f32.gmra.mrb[0].mxu0 %v145
    %v356 = vpop.f32.mrb[0].mxu0
    %v357 = vadd.f32 %v66, %v356
    %v358 = vpop.f32.mrb[0].mxu0
    %359 = vmatprep.mubr.f32.mxu0 0.0
    %360 = vmatmul.mubr.f32.gmra.mrb[0].mxu0 %v148
    %v361 = vpop.f32.mrb[0].mxu0
    %v362 = vadd.f32 %v66, %v361
    %v363 = vpop.f32.mrb[0].mxu0
    %364 = vmatprep.mubr.f32.mxu0 0.0
    %365 = vmatmul.mubr.f32.gmra.mrb[0].mxu0 %v151
    %v366 = vpop.f32.mrb[0].mxu0
    %v367 = vadd.f32 %v66, %v366
    %v368 = vpop.f32.mrb[0].mxu0
    %369 = vmatprep.mubr.f32.mxu0 0.0
    %370 = vmatmul.mubr.f32.gmra.mrb[0].mxu0 %v154
    %v371 = vpop.f32.mrb[0].mxu0
    %v372 = vadd.f32 %v66, %v371
    %v373 = vpop.f32.mrb[0].mxu0
    %374 = vmatprep.mubr.f32.mxu0 0.0
    %375 = vmatmul.mubr.f32.gmra.mrb[0].mxu0 %v157
    %v376 = vpop.f32.mrb[0].mxu0
    %v377 = vadd.f32 %v66, %v376
    %v378 = vpop.f32.mrb[0].mxu0
    %379 = vmatprep.mubr.f32.mxu0 0.0
    %380 = vmatmul.mubr.f32.gmra.mrb[0].mxu0 %v160
    %v381 = vpop.f32.mrb[0].mxu0
    %v382 = vadd.f32 %v66, %v381
    %v383 = vpop.f32.mrb[0].mxu0
    %384 = vmatprep.mubr.f32.mxu0 0.0
    %385 = vmatmul.mubr.f32.gmra.mrb[0].mxu0 %v163
    %v386 = vpop.f32.mrb[0].mxu0
    %v387 = vadd.f32 %v66, %v386
    %v388 = vpop.f32.mrb[0].mxu0
    %389 = vdwg.mxu0
    %v390 = vmax.f32 %v232, 0.0
    %v391 = vmax.f32 %v237, 0.0
    %v392 = vmax.f32 %v242, 0.0
    %v393 = vmax.f32 %v247, 0.0
    %v394 = vmax.f32 %v252, 0.0
    %v395 = vmax.f32 %v257, 0.0
    %v396 = vmax.f32 %v262, 0.0
    %v397 = vmax.f32 %v267, 0.0
    %v398 = vmax.f32 %v272, 0.0
    %v399 = vmax.f32 %v277, 0.0
    %v400 = vmax.f32 %v282, 0.0
    %v401 = vmax.f32 %v287, 0.0
    %v402 = vmax.f32 %v292, 0.0
    %v403 = vmax.f32 %v297, 0.0
    %v404 = vmax.f32 %v302, 0.0
    %v405 = vmax.f32 %v307, 0.0
    %v406 = vmax.f32 %v312, 0.0
    %v407 = vmax.f32 %v317, 0.0
    %v408 = vmax.f32 %v322, 0.0
    %v409 = vmax.f32 %v327, 0.0
    %v410 = vmax.f32 %v332, 0.0
    %v411 = vmax.f32 %v337, 0.0
    %v412 = vmax.f32 %v342, 0.0
    %v413 = vmax.f32 %v347, 0.0
    %v414 = vmax.f32 %v352, 0.0
    %v415 = vmax.f32 %v357, 0.0
    %v416 = vmax.f32 %v362, 0.0
    %v417 = vmax.f32 %v367, 0.0
    %v418 = vmax.f32 %v372, 0.0
    %v419 = vmax.f32 %v377, 0.0
    %v420 = vmax.f32 %v382, 0.0
    %v421 = vmax.f32 %v387, 0.0
    %v422 = vld [vmem:[%s3] sm:$0xff]
    %v423 = vld [vmem:[%s3 + $0x8] sm:$0xff]
    %v424 = vld [vmem:[%s3 + $0x10] sm:$0xff]
    %v425 = vld [vmem:[%s3 + $0x18] sm:$0xff]
    %v426 = vld [vmem:[%s3 + $0x20] sm:$0xff]
    %v427 = vld [vmem:[%s3 + $0x28] sm:$0xff]
    %v428 = vld [vmem:[%s3 + $0x30] sm:$0xff]
    %v429 = vld [vmem:[%s3 + $0x38] sm:$0xff]
    %v430 = vld [vmem:[%s3 + $0x40] sm:$0xff]
    %v431 = vld [vmem:[%s3 + $0x48] sm:$0xff]
    %v432 = vld [vmem:[%s3 + $0x50] sm:$0xff]
    %v433 = vld [vmem:[%s3 + $0x58] sm:$0xff]
    %v434 = vld [vmem:[%s3 + $0x60] sm:$0xff]
    %v435 = vld [vmem:[%s3 + $0x68] sm:$0xff]
    %v436 = vld [vmem:[%s3 + $0x70] sm:$0xff]
    %v437 = vld [vmem:[%s3 + $0x78] sm:$0xff]
    %v438 = vld [vmem:[%s4] sm:$0x1]
    %v440 = vlaneseq
    %v441 = vshrl.u32 %v440, 7
    %v442 = vsub.s32 0, %v441
    %v443 = vrot.slane %v438, %v442
    %445 = vmatprep.subr.mxu0 0.0
    %446 = vmatpush1.msra.mxu0 %v422
    %447 = vmatprep.subr.mxu0 0.0
    %448 = vmatpush1.msra.mxu0 %v423
    %449 = vmatprep.subr.mxu0 0.0
    %450 = vmatpush1.msra.mxu0 %v424
    %451 = vmatprep.subr.mxu0 0.0
    %452 = vmatpush1.msra.mxu0 %v425
    %453 = vmatprep.subr.mxu0 0.0
    %454 = vmatpush1.msra.mxu0 %v426
    %455 = vmatprep.subr.mxu0 0.0
    %456 = vmatpush1.msra.mxu0 %v427
    %457 = vmatprep.subr.mxu0 0.0
    %458 = vmatpush1.msra.mxu0 %v428
    %459 = vmatprep.subr.mxu0 0.0
    %460 = vmatpush1.msra.mxu0 %v429
    %461 = vmatprep.subr.mxu0 0.0
    %462 = vmatpush1.msra.mxu0 %v430
    %463 = vmatprep.subr.mxu0 0.0
    %464 = vmatpush1.msra.mxu0 %v431
    %465 = vmatprep.subr.mxu0 0.0
    %466 = vmatpush1.msra.mxu0 %v432
    %467 = vmatprep.subr.mxu0 0.0
    %468 = vmatpush1.msra.mxu0 %v433
    %469 = vmatprep.subr.mxu0 0.0
    %470 = vmatpush1.msra.mxu0 %v434
    %471 = vmatprep.subr.mxu0 0.0
    %472 = vmatpush1.msra.mxu0 %v435
    %473 = vmatprep.subr.mxu0 0.0
    %474 = vmatpush1.msra.mxu0 %v436
    %475 = vmatprep.subr.mxu0 0.0
    %476 = vmatpush1.msra.mxu0 %v437
    %477 = vmatprep.subr.mxu0 0.0
    %478 = vmatpush1.msra.mxu0 0.0
    %479 = vmatprep.subr.mxu0 0.0
    %480 = vmatpush1.msra.mxu0 0.0
    %481 = vmatprep.subr.mxu0 0.0
    %482 = vmatpush1.msra.mxu0 0.0
    %483 = vmatprep.subr.mxu0 0.0
    %484 = vmatpush1.msra.mxu0 0.0
    %485 = vmatprep.subr.mxu0 0.0
    %486 = vmatpush1.msra.mxu0 0.0
    %487 = vmatprep.subr.mxu0 0.0
    %488 = vmatpush1.msra.mxu0 0.0
    %489 = vmatprep.subr.mxu0 0.0
    %490 = vmatpush1.msra.mxu0 0.0
    %491 = vmatprep.subr.mxu0 0.0
    %492 = vmatpush1.msra.mxu0 0.0
    %493 = vmatprep.subr.mxu0 0.0
    %494 = vmatpush1.msra.mxu0 0.0
    %495 = vmatprep.subr.mxu0 0.0
    %496 = vmatpush1.msra.mxu0 0.0
    %497 = vmatprep.subr.mxu0 0.0
    %498 = vmatpush1.msra.mxu0 0.0
    %499 = vmatprep.subr.mxu0 0.0
    %500 = vmatpush1.msra.mxu0 0.0
    %501 = vmatprep.subr.mxu0 0.0
    %502 = vmatpush1.msra.mxu0 0.0
    %503 = vmatprep.subr.mxu0 0.0
    %504 = vmatpush1.msra.mxu0 0.0
    %505 = vmatprep.subr.mxu0 0.0
    %506 = vmatpush1.msra.mxu0 0.0
    %507 = vmatprep.subr.mxu0 0.0
    %508 = vmatpush1.msra.mxu0 0.0
    %509 = vmatprep.mubr.f32.mxu0 0.0
    %510 = vmatmul.mubr.f32.gmra.mrb[0].mxu0 %v390
    %v511 = vpop.f32.mrb[0].mxu0
    %v512 = vadd.f32 %v443, %v511
    %v513 = vpop.f32.mrb[0].mxu0
    %514 = vmatprep.mubr.f32.mxu0 0.0
    %515 = vmatmul.mubr.f32.gmra.mrb[0].mxu0 %v391
    %v516 = vpop.f32.mrb[0].mxu0
    %v517 = vadd.f32 %v443, %v516
    %v518 = vpop.f32.mrb[0].mxu0
    %519 = vmatprep.mubr.f32.mxu0 0.0
    %520 = vmatmul.mubr.f32.gmra.mrb[0].mxu0 %v392
    %v521 = vpop.f32.mrb[0].mxu0
    %v522 = vadd.f32 %v443, %v521
    %v523 = vpop.f32.mrb[0].mxu0
    %524 = vmatprep.mubr.f32.mxu0 0.0
    %525 = vmatmul.mubr.f32.gmra.mrb[0].mxu0 %v393
    %v526 = vpop.f32.mrb[0].mxu0
    %v527 = vadd.f32 %v443, %v526
    %v528 = vpop.f32.mrb[0].mxu0
    %529 = vmatprep.mubr.f32.mxu0 0.0
    %530 = vmatmul.mubr.f32.gmra.mrb[0].mxu0 %v394
    %v531 = vpop.f32.mrb[0].mxu0
    %v532 = vadd.f32 %v443, %v531
    %v533 = vpop.f32.mrb[0].mxu0
    %534 = vmatprep.mubr.f32.mxu0 0.0
    %535 = vmatmul.mubr.f32.gmra.mrb[0].mxu0 %v395
    %v536 = vpop.f32.mrb[0].mxu0
    %v537 = vadd.f32 %v443, %v536
    %v538 = vpop.f32.mrb[0].mxu0
    %539 = vmatprep.mubr.f32.mxu0 0.0
    %540 = vmatmul.mubr.f32.gmra.mrb[0].mxu0 %v396
    %v541 = vpop.f32.mrb[0].mxu0
    %v542 = vadd.f32 %v443, %v541
    %v543 = vpop.f32.mrb[0].mxu0
    %544 = vmatprep.mubr.f32.mxu0 0.0
    %545 = vmatmul.mubr.f32.gmra.mrb[0].mxu0 %v397
    %v546 = vpop.f32.mrb[0].mxu0
    %v547 = vadd.f32 %v443, %v546
    %v548 = vpop.f32.mrb[0].mxu0
    %549 = vmatprep.mubr.f32.mxu0 0.0
    %550 = vmatmul.mubr.f32.gmra.mrb[0].mxu0 %v398
    %v551 = vpop.f32.mrb[0].mxu0
    %v552 = vadd.f32 %v443, %v551
    %v553 = vpop.f32.mrb[0].mxu0
    %554 = vmatprep.mubr.f32.mxu0 0.0
    %555 = vmatmul.mubr.f32.gmra.mrb[0].mxu0 %v399
    %v556 = vpop.f32.mrb[0].mxu0
    %v557 = vadd.f32 %v443, %v556
    %v558 = vpop.f32.mrb[0].mxu0
    %559 = vmatprep.mubr.f32.mxu0 0.0
    %560 = vmatmul.mubr.f32.gmra.mrb[0].mxu0 %v400
    %v561 = vpop.f32.mrb[0].mxu0
    %v562 = vadd.f32 %v443, %v561
    %v563 = vpop.f32.mrb[0].mxu0
    %564 = vmatprep.mubr.f32.mxu0 0.0
    %565 = vmatmul.mubr.f32.gmra.mrb[0].mxu0 %v401
    %v566 = vpop.f32.mrb[0].mxu0
    %v567 = vadd.f32 %v443, %v566
    %v568 = vpop.f32.mrb[0].mxu0
    %569 = vmatprep.mubr.f32.mxu0 0.0
    %570 = vmatmul.mubr.f32.gmra.mrb[0].mxu0 %v402
    %v571 = vpop.f32.mrb[0].mxu0
    %v572 = vadd.f32 %v443, %v571
    %v573 = vpop.f32.mrb[0].mxu0
    %574 = vmatprep.mubr.f32.mxu0 0.0
    %575 = vmatmul.mubr.f32.gmra.mrb[0].mxu0 %v403
    %v576 = vpop.f32.mrb[0].mxu0
    %v577 = vadd.f32 %v443, %v576
    %v578 = vpop.f32.mrb[0].mxu0
    %579 = vmatprep.mubr.f32.mxu0 0.0
    %580 = vmatmul.mubr.f32.gmra.mrb[0].mxu0 %v404
    %v581 = vpop.f32.mrb[0].mxu0
    %v582 = vadd.f32 %v443, %v581
    %v583 = vpop.f32.mrb[0].mxu0
    %584 = vmatprep.mubr.f32.mxu0 0.0
    %585 = vmatmul.mubr.f32.gmra.mrb[0].mxu0 %v405
    %v586 = vpop.f32.mrb[0].mxu0
    %v587 = vadd.f32 %v443, %v586
    %v588 = vpop.f32.mrb[0].mxu0
    %589 = vmatprep.mubr.f32.mxu0 0.0
    %590 = vmatmul.mubr.f32.gmra.mrb[0].mxu0 %v406
    %v591 = vpop.f32.mrb[0].mxu0
    %v592 = vadd.f32 %v443, %v591
    %v593 = vpop.f32.mrb[0].mxu0
    %594 = vmatprep.mubr.f32.mxu0 0.0
    %595 = vmatmul.mubr.f32.gmra.mrb[0].mxu0 %v407
    %v596 = vpop.f32.mrb[0].mxu0
    %v597 = vadd.f32 %v443, %v596
    %v598 = vpop.f32.mrb[0].mxu0
    %599 = vmatprep.mubr.f32.mxu0 0.0
    %600 = vmatmul.mubr.f32.gmra.mrb[0].mxu0 %v408
    %v601 = vpop.f32.mrb[0].mxu0
    %v602 = vadd.f32 %v443, %v601
    %v603 = vpop.f32.mrb[0].mxu0
    %604 = vmatprep.mubr.f32.mxu0 0.0
    %605 = vmatmul.mubr.f32.gmra.mrb[0].mxu0 %v409
    %v606 = vpop.f32.mrb[0].mxu0
    %v607 = vadd.f32 %v443, %v606
    %v608 = vpop.f32.mrb[0].mxu0
    %609 = vmatprep.mubr.f32.mxu0 0.0
    %610 = vmatmul.mubr.f32.gmra.mrb[0].mxu0 %v410
    %v611 = vpop.f32.mrb[0].mxu0
    %v612 = vadd.f32 %v443, %v611
    %v613 = vpop.f32.mrb[0].mxu0
    %614 = vmatprep.mubr.f32.mxu0 0.0
    %615 = vmatmul.mubr.f32.gmra.mrb[0].mxu0 %v411
    %v616 = vpop.f32.mrb[0].mxu0
    %v617 = vadd.f32 %v443, %v616
    %v618 = vpop.f32.mrb[0].mxu0
    %619 = vmatprep.mubr.f32.mxu0 0.0
    %620 = vmatmul.mubr.f32.gmra.mrb[0].mxu0 %v412
    %v621 = vpop.f32.mrb[0].mxu0
    %v622 = vadd.f32 %v443, %v621
    %v623 = vpop.f32.mrb[0].mxu0
    %624 = vmatprep.mubr.f32.mxu0 0.0
    %625 = vmatmul.mubr.f32.gmra.mrb[0].mxu0 %v413
    %v626 = vpop.f32.mrb[0].mxu0
    %v627 = vadd.f32 %v443, %v626
    %v628 = vpop.f32.mrb[0].mxu0
    %629 = vmatprep.mubr.f32.mxu0 0.0
    %630 = vmatmul.mubr.f32.gmra.mrb[0].mxu0 %v414
    %v631 = vpop.f32.mrb[0].mxu0
    %v632 = vadd.f32 %v443, %v631
    %v633 = vpop.f32.mrb[0].mxu0
    %634 = vmatprep.mubr.f32.mxu0 0.0
    %635 = vmatmul.mubr.f32.gmra.mrb[0].mxu0 %v415
    %v636 = vpop.f32.mrb[0].mxu0
    %v637 = vadd.f32 %v443, %v636
    %v638 = vpop.f32.mrb[0].mxu0
    %639 = vmatprep.mubr.f32.mxu0 0.0
    %640 = vmatmul.mubr.f32.gmra.mrb[0].mxu0 %v416
    %v641 = vpop.f32.mrb[0].mxu0
    %v642 = vadd.f32 %v443, %v641
    %v643 = vpop.f32.mrb[0].mxu0
    %644 = vmatprep.mubr.f32.mxu0 0.0
    %645 = vmatmul.mubr.f32.gmra.mrb[0].mxu0 %v417
    %v646 = vpop.f32.mrb[0].mxu0
    %v647 = vadd.f32 %v443, %v646
    %v648 = vpop.f32.mrb[0].mxu0
    %649 = vmatprep.mubr.f32.mxu0 0.0
    %650 = vmatmul.mubr.f32.gmra.mrb[0].mxu0 %v418
    %v651 = vpop.f32.mrb[0].mxu0
    %v652 = vadd.f32 %v443, %v651
    %v653 = vpop.f32.mrb[0].mxu0
    %654 = vmatprep.mubr.f32.mxu0 0.0
    %655 = vmatmul.mubr.f32.gmra.mrb[0].mxu0 %v419
    %v656 = vpop.f32.mrb[0].mxu0
    %v657 = vadd.f32 %v443, %v656
    %v658 = vpop.f32.mrb[0].mxu0
    %659 = vmatprep.mubr.f32.mxu0 0.0
    %660 = vmatmul.mubr.f32.gmra.mrb[0].mxu0 %v420
    %v661 = vpop.f32.mrb[0].mxu0
    %v662 = vadd.f32 %v443, %v661
    %v663 = vpop.f32.mrb[0].mxu0
    %664 = vmatprep.mubr.f32.mxu0 0.0
    %665 = vmatmul.mubr.f32.gmra.mrb[0].mxu0 %v421
    %v666 = vpop.f32.mrb[0].mxu0
    %v667 = vadd.f32 %v443, %v666
    %v668 = vpop.f32.mrb[0].mxu0
    %669 = vdwg.mxu0
    %v670 = vmax.f32 %v512, 0.0
    %v671 = vmax.f32 %v517, 0.0
    %v672 = vmax.f32 %v522, 0.0
    %v673 = vmax.f32 %v527, 0.0
    %v674 = vmax.f32 %v532, 0.0
    %v675 = vmax.f32 %v537, 0.0
    %v676 = vmax.f32 %v542, 0.0
    %v677 = vmax.f32 %v547, 0.0
    %v678 = vmax.f32 %v552, 0.0
    %v679 = vmax.f32 %v557, 0.0
    %v680 = vmax.f32 %v562, 0.0
    %v681 = vmax.f32 %v567, 0.0
    %v682 = vmax.f32 %v572, 0.0
    %v683 = vmax.f32 %v577, 0.0
    %v684 = vmax.f32 %v582, 0.0
    %v685 = vmax.f32 %v587, 0.0
    %v686 = vmax.f32 %v592, 0.0
    %v687 = vmax.f32 %v597, 0.0
    %v688 = vmax.f32 %v602, 0.0
    %v689 = vmax.f32 %v607, 0.0
    %v690 = vmax.f32 %v612, 0.0
    %v691 = vmax.f32 %v617, 0.0
    %v692 = vmax.f32 %v622, 0.0
    %v693 = vmax.f32 %v627, 0.0
    %v694 = vmax.f32 %v632, 0.0
    %v695 = vmax.f32 %v637, 0.0
    %v696 = vmax.f32 %v642, 0.0
    %v697 = vmax.f32 %v647, 0.0
    %v698 = vmax.f32 %v652, 0.0
    %v699 = vmax.f32 %v657, 0.0
    %v700 = vmax.f32 %v662, 0.0
    %v701 = vmax.f32 %v667, 0.0
    %v702 = vld [vmem:[%s5] sm:$0x1]
    %s703 = sld [smem:[#allocation2]]
    %v704 = vstv %s703
    %705 = vmatprep.subr.mxu0 0.0
    %706 = vmatpush1.xpose.msra.mxu0 %v670
    %707 = vmatprep.subr.mxu0 0.0
    %708 = vmatpush1.xpose.msra.mxu0 %v671
    %709 = vmatprep.subr.mxu0 0.0
    %710 = vmatpush1.xpose.msra.mxu0 %v672
    %711 = vmatprep.subr.mxu0 0.0
    %712 = vmatpush1.xpose.msra.mxu0 %v673
    %713 = vmatprep.subr.mxu0 0.0
    %714 = vmatpush1.xpose.msra.mxu0 %v674
    %715 = vmatprep.subr.mxu0 0.0
    %716 = vmatpush1.xpose.msra.mxu0 %v675
    %717 = vmatprep.subr.mxu0 0.0
    %718 = vmatpush1.xpose.msra.mxu0 %v676
    %719 = vmatprep.subr.mxu0 0.0
    %720 = vmatpush1.xpose.msra.mxu0 %v677
    %721 = vmatprep.subr.mxu0 0.0
    %722 = vmatpush1.xpose.msra.mxu0 %v678
    %723 = vmatprep.subr.mxu0 0.0
    %724 = vmatpush1.xpose.msra.mxu0 %v679
    %725 = vmatprep.subr.mxu0 0.0
    %726 = vmatpush1.xpose.msra.mxu0 %v680
    %727 = vmatprep.subr.mxu0 0.0
    %728 = vmatpush1.xpose.msra.mxu0 %v681
    %729 = vmatprep.subr.mxu0 0.0
    %730 = vmatpush1.xpose.msra.mxu0 %v682
    %731 = vmatprep.subr.mxu0 0.0
    %732 = vmatpush1.xpose.msra.mxu0 %v683
    %733 = vmatprep.subr.mxu0 0.0
    %734 = vmatpush1.xpose.msra.mxu0 %v684
    %735 = vmatprep.subr.mxu0 0.0
    %736 = vmatpush1.xpose.msra.mxu0 %v685
    %737 = vmatprep.subr.mxu0 0.0
    %738 = vmatpush1.xpose.msra.mxu0 %v686
    %739 = vmatprep.subr.mxu0 0.0
    %740 = vmatpush1.xpose.msra.mxu0 %v687
    %741 = vmatprep.subr.mxu0 0.0
    %742 = vmatpush1.xpose.msra.mxu0 %v688
    %743 = vmatprep.subr.mxu0 0.0
    %744 = vmatpush1.xpose.msra.mxu0 %v689
    %745 = vmatprep.subr.mxu0 0.0
    %746 = vmatpush1.xpose.msra.mxu0 %v690
    %747 = vmatprep.subr.mxu0 0.0
    %748 = vmatpush1.xpose.msra.mxu0 %v691
    %749 = vmatprep.subr.mxu0 0.0
    %750 = vmatpush1.xpose.msra.mxu0 %v692
    %751 = vmatprep.subr.mxu0 0.0
    %752 = vmatpush1.xpose.msra.mxu0 %v693
    %753 = vmatprep.subr.mxu0 0.0
    %754 = vmatpush1.xpose.msra.mxu0 %v694
    %755 = vmatprep.subr.mxu0 0.0
    %756 = vmatpush1.xpose.msra.mxu0 %v695
    %757 = vmatprep.subr.mxu0 0.0
    %758 = vmatpush1.xpose.msra.mxu0 %v696
    %759 = vmatprep.subr.mxu0 0.0
    %760 = vmatpush1.xpose.msra.mxu0 %v697
    %761 = vmatprep.subr.mxu0 0.0
    %762 = vmatpush1.xpose.msra.mxu0 %v698
    %763 = vmatprep.subr.mxu0 0.0
    %764 = vmatpush1.xpose.msra.mxu0 %v699
    %765 = vmatprep.subr.mxu0 0.0
    %766 = vmatpush1.xpose.msra.mxu0 %v700
    %767 = vmatprep.subr.mxu0 0.0
    %768 = vmatpush1.xpose.msra.mxu0 %v701
    %769 = vmatprep.mubr.f32.mxu0 0.0
    %770 = vmatmul.mubr.f32.gmra.mrb[0].mxu0 %v702
    %v771 = vpop.f32.mrb[0].mxu0
    %v772 = vadd.f32 %v704, %v771
    %v773 = vpop.f32.mrb[0].mxu0
    %v774 = vadd.f32 %v704, %v773
    %775 = vdwg.mxu0
    %v778 = vcombine.low %v772, %v774
    %v780 = vunpack.c.l.s4 1966171168
    %v781 = vunpack.c.0.s8 %v780
    %v782 = vlaneseq
    %v783 = vshrl.u32 %v782, 7
    %v784 = vsub.s32 %v781, %v783
    %v785 = vrot.slane %v778, %v784
    %v787 = vunpack.c.l.s4 1966171168
    %v788 = vunpack.c.0.s8 %v787
    %v789 = vlaneseq
    %v790 = vshrl.u32 %v789, 7
    %v791 = vsub.s32 %v788, %v790
    %v792 = vrot.slane %v785, %v791
    %v794 = vlaneseq
    %vm795 = vcmp.ge.s32.totalorder %v794, 0
    %vm796 = vcmp.lt.s32.totalorder %v794, 256
    %vm797 = vmand %vm795, %vm796
    %798 = vst.msk [vmem:[#allocation3] sm:$0x3] %vm797, %v792
    // Predicated region
    $region30: #{tpu_custom_call.1} parent=1 // pred_check
      _
    $region31: #{tpu_custom_call.1} parent=1 // pred_check_branch
      %800 = sbr.rel (0) target = $region33
    $region32: #{tpu_custom_call.1} parent=1 // pred_region
      %s802 = ssub.s32 32, 32
      %803 = vsyncadd [#allocation4], %s802
      %s805 = sshll.u32 [#allocation3], 4
      %s806 = int_to_ptr.vmem [resolvable:$true] %s805
      %808 = dma.vmem_to_hbm [thread:$0]  %s806, 32, %s7, [#allocation4]
    $region33: #{tpu_custom_call.1} parent=1 // pred_fallthru
      _
    // Predicated region
    $region34: #{tpu_custom_call.1} parent=1 // pred_check
      _
    $region35: #{tpu_custom_call.1} parent=1 // pred_check_branch
      %810 = sbr.rel (0) target = $region37
    $region36: #{tpu_custom_call.1} parent=1 // pred_region
      %811 = dma.done [#allocation4], 32
    $region37: #{tpu_custom_call.1} parent=1 // pred_fallthru
      _
    %812 = vsyncpa [#allocation4], 1

</llo_original>
